<compile_context>
chip_gen: v7x
topology: tpu7x:2x2x1
jax: 0.10.0
libtpu: 0.0.40
codegen_flags: <defaults>
</compile_context>

<pallas_src>
import functools

import jax
import jax.numpy as jnp
from jax import lax
from jax.experimental import pallas as pl
from jax.experimental.pallas import tpu as pltpu

LN_EPS = 1e-5
LEAKY_SLOPE = 0.1


def _round_up(n, m):
    return (n + m - 1) // m * m


def _layernorm(x, gamma, beta, n_true):
    """LayerNorm over the last dim; statistics use the true width `n_true`
    even if the lane dim is zero-padded to a multiple of 128."""
    p = x.shape[-1]
    inv_n = 1.0 / float(n_true)
    if n_true != p:
        mask = (lax.broadcasted_iota(jnp.int32, (1, p), 1) < n_true).astype(x.dtype)
        x = x * mask
        mu = jnp.sum(x, axis=-1, keepdims=True) * inv_n
        xc = (x - mu) * mask
    else:
        mu = jnp.sum(x, axis=-1, keepdims=True) * inv_n
        xc = x - mu
    var = jnp.sum(xc * xc, axis=-1, keepdims=True) * inv_n
    return xc * lax.rsqrt(var + LN_EPS) * gamma + beta


def _decoder_kernel(x_ref, vec_ref, w0_ref, w1_ref, w2_ref, o_ref, *, dims):
    """dims = (E_true, H_true, E_pad, H_pad, O_pad), all static Python ints."""
    E, H, E_p, H_p, O_p = dims

    x = x_ref[...].astype(jnp.float32)

    # packed per-feature vectors (f32), row layout:
    # 0:g_in 1:b_in 2:b0 3:g_h 4:b_h 5:b1 6:b2 7:unused
    g_in = vec_ref[0:1, :E_p]
    b_in = vec_ref[1:2, :E_p]
    b0 = vec_ref[2:3, :H_p]
    g_h = vec_ref[3:4, :H_p]
    b_h = vec_ref[4:5, :H_p]
    b1 = vec_ref[5:6, :H_p]
    b2 = vec_ref[6:7, :O_p]

    # input LayerNorm (f32)
    x = _layernorm(x, g_in, b_in, E)

    # l0 -> LeakyReLU(0.1); bf16 MXU operands, f32 accumulate.
    # TODO(synk): training-mode nn.Dropout(0.3) not implemented (inference semantics).
    h = jnp.dot(x.astype(jnp.bfloat16), w0_ref[...],
                preferred_element_type=jnp.float32) + b0
    h = jnp.where(h >= 0, h, LEAKY_SLOPE * h)

    # hidden LayerNorm (f32)
    h = _layernorm(h, g_h, b_h, H)

    # l1 -> LeakyReLU(0.1)
    h = jnp.dot(h.astype(jnp.bfloat16), w1_ref[...],
                preferred_element_type=jnp.float32) + b1
    h = jnp.where(h >= 0, h, LEAKY_SLOPE * h)

    # l2 -> tanh (lane-dense output: O_p is a multiple of 128)
    y = jnp.dot(h.astype(jnp.bfloat16), w2_ref[...],
                preferred_element_type=jnp.float32) + b2
    o_ref[...] = jnp.tanh(y).astype(o_ref.dtype)


def decoder_forward(x, params):
    """x: [B, E] float32. params: dict with (in, out)-layout f32 weights."""
    B, E = x.shape
    H = params["w0"].shape[1]
    O = params["w2"].shape[1]

    # Lane-dense padded feature widths.
    E_p, H_p, O_p = _round_up(E, 128), _round_up(H, 128), _round_up(O, 128)
    w_max = max(E_p, H_p, O_p)

    def pad2(w, r, c):
        return jnp.pad(w.astype(jnp.float32), ((0, r - w.shape[0]), (0, c - w.shape[1])))

    # bf16 weights (MXU-native); padded rows/cols are zero so they are inert.
    w0 = pad2(params["w0"], E_p, H_p).astype(jnp.bfloat16)
    w1 = pad2(params["w1"], H_p, H_p).astype(jnp.bfloat16)
    w2 = pad2(params["w2"], H_p, O_p).astype(jnp.bfloat16)

    def row(v):
        v = v.reshape(1, -1).astype(jnp.float32)
        return jnp.pad(v, ((0, 0), (0, w_max - v.shape[1])))

    vecs = jnp.concatenate(
        [row(params["g_in"]), row(params["b_in"]),
         row(params["b0"]), row(params["g_h"]),
         row(params["b_h"]), row(params["b1"]),
         row(params["b2"]), jnp.zeros((1, w_max), jnp.float32)],
        axis=0)  # (8, w_max)

    # Batch blocking: one block for small batches, 512-row blocks otherwise.
    B8 = _round_up(B, 8)
    block_rows = B8 if B8 <= 1024 else 512
    B_p = _round_up(B8, block_rows)
    x_p = jnp.pad(x.astype(jnp.float32), ((0, B_p - B), (0, E_p - E)))
    n_blocks = B_p // block_rows

    kernel = functools.partial(_decoder_kernel, dims=(E, H, E_p, H_p, O_p))

    out = pl.pallas_call(
        kernel,
        out_shape=jax.ShapeDtypeStruct((B_p, O_p), jnp.float32),
        grid_spec=pltpu.PrefetchScalarGridSpec(
            num_scalar_prefetch=0,
            grid=(n_blocks,),
            in_specs=[
                pl.BlockSpec((block_rows, E_p), lambda i: (i, 0)),  # x tile
                pl.BlockSpec((8, w_max), lambda i: (0, 0)),         # packed vectors
                pl.BlockSpec((E_p, H_p), lambda i: (0, 0)),         # W0 (bf16)
                pl.BlockSpec((H_p, H_p), lambda i: (0, 0)),         # W1 (bf16)
                pl.BlockSpec((H_p, O_p), lambda i: (0, 0)),         # W2 (bf16)
            ],
            out_specs=pl.BlockSpec((block_rows, O_p), lambda i: (i, 0)),
        ),
        compiler_params=pltpu.CompilerParams(
            dimension_semantics=(("parallel",) if n_blocks > 1 else ("arbitrary",))),
    )(x_p, vecs, w0, w1, w2)

    return out[:B, :O]


def init_params(key, emb_size, hidden_size, out_size):
    """Deterministic synthetic parameters (shapes match the PyTorch module),
    linear weights pre-transposed to (in, out)."""
    ks = jax.random.split(key, 6)

    def linear(kw, kb, fan_in, fan_out):
        bound = 1.0 / jnp.sqrt(fan_in)
        w = jax.random.uniform(kw, (fan_in, fan_out), jnp.float32, -bound, bound)
        b = jax.random.uniform(kb, (1, fan_out), jnp.float32, -bound, bound)
        return w, b

    w0, b0 = linear(ks[0], ks[1], emb_size, hidden_size)
    w1, b1 = linear(ks[2], ks[3], hidden_size, hidden_size)
    w2, b2 = linear(ks[4], ks[5], hidden_size, out_size)
    return {
        "g_in": jnp.ones((1, emb_size), jnp.float32),
        "b_in": jnp.zeros((1, emb_size), jnp.float32),
        "w0": w0, "b0": b0,
        "g_h": jnp.ones((1, hidden_size), jnp.float32),
        "b_h": jnp.zeros((1, hidden_size), jnp.float32),
        "w1": w1, "b1": b1,
        "w2": w2, "b2": b2,
    }


def decoder_reference(x, p, *, bf16_matmul=True):
    """Pure-JAX reference. bf16_matmul=True mirrors the kernel's MXU dtype."""
    def ln(v, g, b):
        mu = jnp.mean(v, -1, keepdims=True)
        var = jnp.mean((v - mu) ** 2, -1, keepdims=True)
        return (v - mu) / jnp.sqrt(var + LN_EPS) * g + b

    def lrelu(v):
        return jnp.where(v >= 0, v, LEAKY_SLOPE * v)

    def mm(a, w):
        if bf16_matmul:
            return jnp.dot(a.astype(jnp.bfloat16), w.astype(jnp.bfloat16),
                           preferred_element_type=jnp.float32)
        return jnp.dot(a, w, preferred_element_type=jnp.float32)

    h = ln(x, p["g_in"], p["b_in"])
    h = lrelu(mm(h, p["w0"]) + p["b0"])
    h = ln(h, p["g_h"], p["b_h"])
    h = lrelu(mm(h, p["w1"]) + p["b1"])
    return jnp.tanh(mm(h, p["w2"]) + p["b2"])


if __name__ == "__main__":
    # Small shapes consistent with the module (HIDDEN_SIZE=256 default);
    # chosen lane-dense so no feature padding is needed at demo size.
    EMB, HID, OUT = 256, 256, 128
    BATCH = 64

    key = jax.random.PRNGKey(0)
    k_x, k_p = jax.random.split(key)
    x = jax.random.normal(k_x, (BATCH, EMB), jnp.float32)
    params = init_params(k_p, EMB, HID, OUT)

    fwd = jax.jit(decoder_forward)
    out = jax.block_until_ready(fwd(x, params))
    assert out.shape == (BATCH, OUT)

    # tight check vs a reference that mirrors the kernel's bf16 matmuls
    ref_bf16 = decoder_reference(x, params, bf16_matmul=True)
    assert jnp.allclose(out, ref_bf16, atol=2e-3, rtol=2e-3), "mismatch vs bf16 reference"

    # loose sanity check vs full-f32 reference (bf16 rounding only)
    ref_f32 = decoder_reference(x, params, bf16_matmul=False)
    assert jnp.allclose(out, ref_f32, atol=0.15, rtol=0.0), "mismatch vs f32 reference"

    print("KERNEL_OK")
</pallas_src>

<mosaic_0001>
module attributes {stable_mosaic.version = 11 : i64} {
  func.func @_decoder_kernel(%arg0: i32, %arg1: memref<64x256xf32, #tpu.memory_space<vmem>>, %arg2: memref<8x256xf32, #tpu.memory_space<vmem>>, %arg3: memref<256x256xbf16, #tpu.memory_space<vmem>>, %arg4: memref<256x256xbf16, #tpu.memory_space<vmem>>, %arg5: memref<256x128xbf16, #tpu.memory_space<vmem>>, %arg6: memref<64x128xf32, #tpu.memory_space<vmem>>) attributes {dimension_semantics = [#tpu.dimension_semantics<arbitrary>], iteration_bounds = array<i64: 1>, scalar_prefetch = 0 : i64, scratch_operands = 0 : i64, tpu.core_type = #tpu.core_type<tc>, window_params = [{transform_indices = @transform_0, window_bounds = array<i64: 64, 256>}, {pipeline_mode = #tpu.pipeline_mode<synchronous>, transform_indices = @transform_1, window_bounds = array<i64: 8, 256>}, {pipeline_mode = #tpu.pipeline_mode<synchronous>, transform_indices = @transform_2, window_bounds = array<i64: 256, 256>}, {pipeline_mode = #tpu.pipeline_mode<synchronous>, transform_indices = @transform_3, window_bounds = array<i64: 256, 256>}, {pipeline_mode = #tpu.pipeline_mode<synchronous>, transform_indices = @transform_4, window_bounds = array<i64: 256, 128>}, {transform_indices = @transform_5, window_bounds = array<i64: 64, 128>}]} {
    %c0 = arith.constant 0 : index
    %c0_0 = arith.constant 0 : index
    %0 = vector.load %arg1[%c0, %c0_0] : memref<64x256xf32, #tpu.memory_space<vmem>>, vector<64x256xf32>
    %c0_1 = arith.constant 0 : index
    %c0_2 = arith.constant 0 : index
    %1 = vector.load %arg2[%c0_1, %c0_2] : memref<8x256xf32, #tpu.memory_space<vmem>>, vector<1x256xf32>
    %c1 = arith.constant 1 : index
    %c0_3 = arith.constant 0 : index
    %2 = vector.load %arg2[%c1, %c0_3] : memref<8x256xf32, #tpu.memory_space<vmem>>, vector<1x256xf32>
    %c2 = arith.constant 2 : index
    %c0_4 = arith.constant 0 : index
    %3 = vector.load %arg2[%c2, %c0_4] : memref<8x256xf32, #tpu.memory_space<vmem>>, vector<1x256xf32>
    %c3 = arith.constant 3 : index
    %c0_5 = arith.constant 0 : index
    %4 = vector.load %arg2[%c3, %c0_5] : memref<8x256xf32, #tpu.memory_space<vmem>>, vector<1x256xf32>
    %c4 = arith.constant 4 : index
    %c0_6 = arith.constant 0 : index
    %5 = vector.load %arg2[%c4, %c0_6] : memref<8x256xf32, #tpu.memory_space<vmem>>, vector<1x256xf32>
    %c5 = arith.constant 5 : index
    %c0_7 = arith.constant 0 : index
    %6 = vector.load %arg2[%c5, %c0_7] : memref<8x256xf32, #tpu.memory_space<vmem>>, vector<1x256xf32>
    %c6 = arith.constant 6 : index
    %c0_8 = arith.constant 0 : index
    %7 = vector.load %arg2[%c6, %c0_8] : memref<8x256xf32, #tpu.memory_space<vmem>>, vector<1x128xf32>
    %cst = arith.constant dense<0.000000e+00> : vector<64xf32>
    %8 = vector.multi_reduction <add>, %0, %cst [1] : vector<64x256xf32> to vector<64xf32>
    %9 = vector.shape_cast %8 : vector<64xf32> to vector<64x1xf32>
    %cst_9 = arith.constant 3.906250e-03 : f32
    %10 = vector.broadcast %cst_9 : f32 to vector<64x1xf32>
    %11 = arith.mulf %9, %10 : vector<64x1xf32>
    %12 = vector.broadcast %11 : vector<64x1xf32> to vector<64x256xf32>
    %13 = arith.subf %0, %12 : vector<64x256xf32>
    %14 = arith.mulf %13, %13 : vector<64x256xf32>
    %cst_10 = arith.constant dense<0.000000e+00> : vector<64xf32>
    %15 = vector.multi_reduction <add>, %14, %cst_10 [1] : vector<64x256xf32> to vector<64xf32>
    %16 = vector.shape_cast %15 : vector<64xf32> to vector<64x1xf32>
    %cst_11 = arith.constant 3.906250e-03 : f32
    %17 = vector.broadcast %cst_11 : f32 to vector<64x1xf32>
    %18 = arith.mulf %16, %17 : vector<64x1xf32>
    %cst_12 = arith.constant 9.99999974E-6 : f32
    %19 = vector.broadcast %cst_12 : f32 to vector<64x1xf32>
    %20 = arith.addf %18, %19 : vector<64x1xf32>
    %21 = math.rsqrt %20 : vector<64x1xf32>
    %22 = vector.broadcast %21 : vector<64x1xf32> to vector<64x256xf32>
    %23 = arith.mulf %13, %22 : vector<64x256xf32>
    %24 = vector.broadcast %1 : vector<1x256xf32> to vector<64x256xf32>
    %25 = arith.mulf %23, %24 : vector<64x256xf32>
    %26 = vector.broadcast %2 : vector<1x256xf32> to vector<64x256xf32>
    %27 = arith.addf %25, %26 : vector<64x256xf32>
    %28 = arith.truncf %27 : vector<64x256xf32> to vector<64x256xbf16>
    %c0_13 = arith.constant 0 : index
    %c0_14 = arith.constant 0 : index
    %29 = vector.load %arg3[%c0_13, %c0_14] : memref<256x256xbf16, #tpu.memory_space<vmem>>, vector<256x256xbf16>
    %cst_15 = arith.constant dense<0.000000e+00> : vector<64x256xf32>
    %30 = tpu.matmul %28, %29, %cst_15 {dimension_numbers = #tpu.dot_dimension_numbers<[1], [0], [0], [1], [0, 0, 1, 1], [], []>} : vector<64x256xbf16>, vector<256x256xbf16>, vector<64x256xf32> -> vector<64x256xf32>
    %31 = vector.broadcast %3 : vector<1x256xf32> to vector<64x256xf32>
    %32 = arith.addf %30, %31 : vector<64x256xf32>
    %cst_16 = arith.constant 0.000000e+00 : f32
    %33 = vector.broadcast %cst_16 : f32 to vector<64x256xf32>
    %34 = arith.cmpf oge, %32, %33 : vector<64x256xf32>
    %cst_17 = arith.constant 1.000000e-01 : f32
    %35 = vector.broadcast %cst_17 : f32 to vector<64x256xf32>
    %36 = arith.mulf %35, %32 : vector<64x256xf32>
    %37 = arith.select %34, %32, %36 : vector<64x256xi1>, vector<64x256xf32>
    %cst_18 = arith.constant dense<0.000000e+00> : vector<64xf32>
    %38 = vector.multi_reduction <add>, %37, %cst_18 [1] : vector<64x256xf32> to vector<64xf32>
    %39 = vector.shape_cast %38 : vector<64xf32> to vector<64x1xf32>
    %cst_19 = arith.constant 3.906250e-03 : f32
    %40 = vector.broadcast %cst_19 : f32 to vector<64x1xf32>
    %41 = arith.mulf %39, %40 : vector<64x1xf32>
    %42 = vector.broadcast %41 : vector<64x1xf32> to vector<64x256xf32>
    %43 = arith.subf %37, %42 : vector<64x256xf32>
    %44 = arith.mulf %43, %43 : vector<64x256xf32>
    %cst_20 = arith.constant dense<0.000000e+00> : vector<64xf32>
    %45 = vector.multi_reduction <add>, %44, %cst_20 [1] : vector<64x256xf32> to vector<64xf32>
    %46 = vector.shape_cast %45 : vector<64xf32> to vector<64x1xf32>
    %cst_21 = arith.constant 3.906250e-03 : f32
    %47 = vector.broadcast %cst_21 : f32 to vector<64x1xf32>
    %48 = arith.mulf %46, %47 : vector<64x1xf32>
    %cst_22 = arith.constant 9.99999974E-6 : f32
    %49 = vector.broadcast %cst_22 : f32 to vector<64x1xf32>
    %50 = arith.addf %48, %49 : vector<64x1xf32>
    %51 = math.rsqrt %50 : vector<64x1xf32>
    %52 = vector.broadcast %51 : vector<64x1xf32> to vector<64x256xf32>
    %53 = arith.mulf %43, %52 : vector<64x256xf32>
    %54 = vector.broadcast %4 : vector<1x256xf32> to vector<64x256xf32>
    %55 = arith.mulf %53, %54 : vector<64x256xf32>
    %56 = vector.broadcast %5 : vector<1x256xf32> to vector<64x256xf32>
    %57 = arith.addf %55, %56 : vector<64x256xf32>
    %58 = arith.truncf %57 : vector<64x256xf32> to vector<64x256xbf16>
    %c0_23 = arith.constant 0 : index
    %c0_24 = arith.constant 0 : index
    %59 = vector.load %arg4[%c0_23, %c0_24] : memref<256x256xbf16, #tpu.memory_space<vmem>>, vector<256x256xbf16>
    %cst_25 = arith.constant dense<0.000000e+00> : vector<64x256xf32>
    %60 = tpu.matmul %58, %59, %cst_25 {dimension_numbers = #tpu.dot_dimension_numbers<[1], [0], [0], [1], [0, 0, 1, 1], [], []>} : vector<64x256xbf16>, vector<256x256xbf16>, vector<64x256xf32> -> vector<64x256xf32>
    %61 = vector.broadcast %6 : vector<1x256xf32> to vector<64x256xf32>
    %62 = arith.addf %60, %61 : vector<64x256xf32>
    %cst_26 = arith.constant 0.000000e+00 : f32
    %63 = vector.broadcast %cst_26 : f32 to vector<64x256xf32>
    %64 = arith.cmpf oge, %62, %63 : vector<64x256xf32>
    %cst_27 = arith.constant 1.000000e-01 : f32
    %65 = vector.broadcast %cst_27 : f32 to vector<64x256xf32>
    %66 = arith.mulf %65, %62 : vector<64x256xf32>
    %67 = arith.select %64, %62, %66 : vector<64x256xi1>, vector<64x256xf32>
    %68 = arith.truncf %67 : vector<64x256xf32> to vector<64x256xbf16>
    %c0_28 = arith.constant 0 : index
    %c0_29 = arith.constant 0 : index
    %69 = vector.load %arg5[%c0_28, %c0_29] : memref<256x128xbf16, #tpu.memory_space<vmem>>, vector<256x128xbf16>
    %cst_30 = arith.constant dense<0.000000e+00> : vector<64x128xf32>
    %70 = tpu.matmul %68, %69, %cst_30 {dimension_numbers = #tpu.dot_dimension_numbers<[1], [0], [0], [1], [0, 0, 1, 1], [], []>} : vector<64x256xbf16>, vector<256x128xbf16>, vector<64x128xf32> -> vector<64x128xf32>
    %71 = vector.broadcast %7 : vector<1x128xf32> to vector<64x128xf32>
    %72 = arith.addf %70, %71 : vector<64x128xf32>
    %73 = math.tanh %72 : vector<64x128xf32>
    %c0_31 = arith.constant 0 : index
    %c0_32 = arith.constant 0 : index
    %74 = vector.load %arg6[%c0_31, %c0_32] : memref<64x128xf32, #tpu.memory_space<vmem>>, vector<64x128xf32>
    tpu.vector_store %arg6[%c0_31, %c0_32], %73 {strides = array<i32>} : memref<64x128xf32, #tpu.memory_space<vmem>>, vector<64x128xf32>,
    return
  }
  func.func @transform_0(%arg0: i32) -> (i32, i32) {
    %c0_i32 = arith.constant 0 : i32
    %c0_i32_0 = arith.constant 0 : i32
    return %arg0, %c0_i32 : i32, i32
  }
  func.func @transform_1(%arg0: i32) -> (i32, i32) {
    %c0_i32 = arith.constant 0 : i32
    %c0_i32_0 = arith.constant 0 : i32
    %c0_i32_1 = arith.constant 0 : i32
    return %c0_i32, %c0_i32_0 : i32, i32
  }
  func.func @transform_2(%arg0: i32) -> (i32, i32) {
    %c0_i32 = arith.constant 0 : i32
    %c0_i32_0 = arith.constant 0 : i32
    %c0_i32_1 = arith.constant 0 : i32
    return %c0_i32, %c0_i32_0 : i32, i32
  }
  func.func @transform_3(%arg0: i32) -> (i32, i32) {
    %c0_i32 = arith.constant 0 : i32
    %c0_i32_0 = arith.constant 0 : i32
    %c0_i32_1 = arith.constant 0 : i32
    return %c0_i32, %c0_i32_0 : i32, i32
  }
  func.func @transform_4(%arg0: i32) -> (i32, i32) {
    %c0_i32 = arith.constant 0 : i32
    %c0_i32_0 = arith.constant 0 : i32
    %c0_i32_1 = arith.constant 0 : i32
    return %c0_i32, %c0_i32_0 : i32, i32
  }
  func.func @transform_5(%arg0: i32) -> (i32, i32) {
    %c0_i32 = arith.constant 0 : i32
    %c0_i32_0 = arith.constant 0 : i32
    return %arg0, %c0_i32 : i32, i32
  }
}

</mosaic_0001>

<llo_original>
// kernel: decoder_forward.1
$region0: #{decoder_forward.1}
  #allocation0 [shape = 'u32[]', space=smem, size = 0x4, offset = 0x4, fixed_abs, tag = 'smem constant byte address 0x4 - core index']
  #allocation1 [shape = 'u32[144,128]{1,0:T(1,128)}', space=vmem, size = 0x12000, scoped, tag = 'internal scratch']
  %s0 = inlined_call_operand.vmem [shape: f32[64,256], index: 0, kind: input, shape index: {}]
  %s1 = inlined_call_operand.vmem [shape: f32[8,256], index: 1, kind: input, shape index: {}]
  %s2 = inlined_call_operand.vmem [shape: bf16[256,256], index: 2, kind: input, shape index: {}]
  %s3 = inlined_call_operand.vmem [shape: bf16[256,256], index: 3, kind: input, shape index: {}]
  %s4 = inlined_call_operand.vmem [shape: bf16[256,128], index: 4, kind: input, shape index: {}]
  %s5 = inlined_call_operand.hbm [shape: f32[64,128], index: 5, kind: output, shape index: {}]
  %s6 = sld [smem:[#allocation0]]
  $region30: #{decoder_forward.1} parent=0
    _
  %s8 = ssub.s32 1, %s6
  %s9 = scalar_select 0, %s8, %s6
  $region1: #{decoder_forward.1} parent=0
    #allocation2 [shape = 'u8[32768]{0}', space=vmem, size = 0x8000, scoped, tag = 'output window, operand 0, single buffered']
    #allocation3 [shape = 's32[1]{0}', space=sflag, size = 0x4, scoped, tag = 'scoped memory for decoder_forward.1']
    %10 = vsyncpa [#allocation3], 0
    // Predicated region
    $region2: #{decoder_forward.1} parent=1 // pred_check
      _
    $region3: #{decoder_forward.1} parent=1 // pred_check_branch
      %12 = sbr.rel (0) target = $region5
    $region4: #{decoder_forward.1} parent=1 // pred_region
      _
    $region5: #{decoder_forward.1} parent=1 // pred_fallthru
      _
    // Predicated region
    $region6: #{decoder_forward.1} parent=1 // pred_check
      _
    $region7: #{decoder_forward.1} parent=1 // pred_check_branch
      %14 = sbr.rel (0) target = $region9
    $region8: #{decoder_forward.1} parent=1 // pred_region
      _
    $region9: #{decoder_forward.1} parent=1 // pred_fallthru
      _
    // Predicated region
    $region10: #{decoder_forward.1} parent=1 // pred_check
      _
    $region11: #{decoder_forward.1} parent=1 // pred_check_branch
      %16 = sbr.rel (0) target = $region13
    $region12: #{decoder_forward.1} parent=1 // pred_region
      _
    $region13: #{decoder_forward.1} parent=1 // pred_fallthru
      _
    // Predicated region
    $region14: #{decoder_forward.1} parent=1 // pred_check
      _
    $region15: #{decoder_forward.1} parent=1 // pred_check_branch
      %18 = sbr.rel (0) target = $region17
    $region16: #{decoder_forward.1} parent=1 // pred_region
      _
    $region17: #{decoder_forward.1} parent=1 // pred_fallthru
      _
    // Predicated region
    $region18: #{decoder_forward.1} parent=1 // pred_check
      _
    $region19: #{decoder_forward.1} parent=1 // pred_check_branch
      %20 = sbr.rel (0) target = $region21
    $region20: #{decoder_forward.1} parent=1 // pred_region
      _
    $region21: #{decoder_forward.1} parent=1 // pred_fallthru
      _
    %v22 = vld [vmem:[%s0] sm:$0xff]
    %v23 = vld [vmem:[%s0 + $0x8] sm:$0xff]
    %v24 = vld [vmem:[%s0 + $0x10] sm:$0xff]
    %v25 = vld [vmem:[%s0 + $0x18] sm:$0xff]
    %v26 = vld [vmem:[%s0 + $0x20] sm:$0xff]
    %v27 = vld [vmem:[%s0 + $0x28] sm:$0xff]
    %v28 = vld [vmem:[%s0 + $0x30] sm:$0xff]
    %v29 = vld [vmem:[%s0 + $0x38] sm:$0xff]
    %v30 = vld [vmem:[%s0 + $0x40] sm:$0xff]
    %v31 = vld [vmem:[%s0 + $0x48] sm:$0xff]
    %v32 = vld [vmem:[%s0 + $0x50] sm:$0xff]
    %v33 = vld [vmem:[%s0 + $0x58] sm:$0xff]
    %v34 = vld [vmem:[%s0 + $0x60] sm:$0xff]
    %v35 = vld [vmem:[%s0 + $0x68] sm:$0xff]
    %v36 = vld [vmem:[%s0 + $0x70] sm:$0xff]
    %v37 = vld [vmem:[%s0 + $0x78] sm:$0xff]
    %v38 = vld [vmem:[%s1] ss:$8 sm:$0x3]
    %s39 = scalar_lea.vmem %s1, 1
    %v40 = vld [vmem:[%s39] ss:$8 sm:$0x3]
    %s41 = scalar_lea.vmem %s1, 2
    %v42 = vld [vmem:[%s41] ss:$8 sm:$0x3]
    %s43 = scalar_lea.vmem %s1, 3
    %v44 = vld [vmem:[%s43] ss:$8 sm:$0x3]
    %s45 = scalar_lea.vmem %s1, 4
    %v46 = vld [vmem:[%s45] ss:$8 sm:$0x3]
    %s47 = scalar_lea.vmem %s1, 5
    %v48 = vld [vmem:[%s47] ss:$8 sm:$0x3]
    %v49 = vld [vmem:[%s1 + $0x6] ss:$0 sm:$0xff]
    %v50 = vadd.f32 %v22, %v23
    %51 = vadd.xlane.f32.xlu0 %v50
    %v52 = vpop.xlane.xlu0 %51
    %v53 = vadd.f32 %v24, %v25
    %54 = vadd.xlane.f32.xlu0 %v53
    %v55 = vpop.xlane.xlu0 %54
    %v56 = vadd.f32 %v26, %v27
    %57 = vadd.xlane.f32.xlu0 %v56
    %v58 = vpop.xlane.xlu0 %57
    %v59 = vadd.f32 %v28, %v29
    %60 = vadd.xlane.f32.xlu0 %v59
    %v61 = vpop.xlane.xlu0 %60
    %v62 = vadd.f32 %v30, %v31
    %63 = vadd.xlane.f32.xlu0 %v62
    %v64 = vpop.xlane.xlu0 %63
    %v65 = vadd.f32 %v32, %v33
    %66 = vadd.xlane.f32.xlu0 %v65
    %v67 = vpop.xlane.xlu0 %66
    %v68 = vadd.f32 %v34, %v35
    %69 = vadd.xlane.f32.xlu0 %v68
    %v70 = vpop.xlane.xlu0 %69
    %v71 = vadd.f32 %v36, %v37
    %72 = vadd.xlane.f32.xlu0 %v71
    %v73 = vpop.xlane.xlu0 %72
    %v74 = vmul.f32 %v52, 0.00390625
    %v75 = vmul.f32 %v55, 0.00390625
    %v76 = vmul.f32 %v58, 0.00390625
    %v77 = vmul.f32 %v61, 0.00390625
    %v78 = vmul.f32 %v64, 0.00390625
    %v79 = vmul.f32 %v67, 0.00390625
    %v80 = vmul.f32 %v70, 0.00390625
    %v81 = vmul.f32 %v73, 0.00390625
    %v82 = vsub.f32 %v22, %v74
    %v83 = vsub.f32 %v23, %v74
    %v84 = vsub.f32 %v24, %v75
    %v85 = vsub.f32 %v25, %v75
    %v86 = vsub.f32 %v26, %v76
    %v87 = vsub.f32 %v27, %v76
    %v88 = vsub.f32 %v28, %v77
    %v89 = vsub.f32 %v29, %v77
    %v90 = vsub.f32 %v30, %v78
    %v91 = vsub.f32 %v31, %v78
    %v92 = vsub.f32 %v32, %v79
    %v93 = vsub.f32 %v33, %v79
    %v94 = vsub.f32 %v34, %v80
    %v95 = vsub.f32 %v35, %v80
    %v96 = vsub.f32 %v36, %v81
    %v97 = vsub.f32 %v37, %v81
    %v98 = vmul.f32 %v82, %v82
    %v99 = vmul.f32 %v83, %v83
    %v100 = vmul.f32 %v84, %v84
    %v101 = vmul.f32 %v85, %v85
    %v102 = vmul.f32 %v86, %v86
    %v103 = vmul.f32 %v87, %v87
    %v104 = vmul.f32 %v88, %v88
    %v105 = vmul.f32 %v89, %v89
    %v106 = vmul.f32 %v90, %v90
    %v107 = vmul.f32 %v91, %v91
    %v108 = vmul.f32 %v92, %v92
    %v109 = vmul.f32 %v93, %v93
    %v110 = vmul.f32 %v94, %v94
    %v111 = vmul.f32 %v95, %v95
    %v112 = vmul.f32 %v96, %v96
    %v113 = vmul.f32 %v97, %v97
    %v114 = vadd.f32 %v98, %v99
    %115 = vadd.xlane.f32.xlu0 %v114
    %v116 = vpop.xlane.xlu0 %115
    %v117 = vadd.f32 %v100, %v101
    %118 = vadd.xlane.f32.xlu0 %v117
    %v119 = vpop.xlane.xlu0 %118
    %v120 = vadd.f32 %v102, %v103
    %121 = vadd.xlane.f32.xlu0 %v120
    %v122 = vpop.xlane.xlu0 %121
    %v123 = vadd.f32 %v104, %v105
    %124 = vadd.xlane.f32.xlu0 %v123
    %v125 = vpop.xlane.xlu0 %124
    %v126 = vadd.f32 %v106, %v107
    %127 = vadd.xlane.f32.xlu0 %v126
    %v128 = vpop.xlane.xlu0 %127
    %v129 = vadd.f32 %v108, %v109
    %130 = vadd.xlane.f32.xlu0 %v129
    %v131 = vpop.xlane.xlu0 %130
    %v132 = vadd.f32 %v110, %v111
    %133 = vadd.xlane.f32.xlu0 %v132
    %v134 = vpop.xlane.xlu0 %133
    %v135 = vadd.f32 %v112, %v113
    %136 = vadd.xlane.f32.xlu0 %v135
    %v137 = vpop.xlane.xlu0 %136
    %v138 = vmul.f32 %v116, 0.00390625
    %v139 = vmul.f32 %v119, 0.00390625
    %v140 = vmul.f32 %v122, 0.00390625
    %v141 = vmul.f32 %v125, 0.00390625
    %v142 = vmul.f32 %v128, 0.00390625
    %v143 = vmul.f32 %v131, 0.00390625
    %v144 = vmul.f32 %v134, 0.00390625
    %v145 = vmul.f32 %v137, 0.00390625
    %v146 = vadd.f32 %v138, 1e-05
    %v147 = vadd.f32 %v139, 1e-05
    %v148 = vadd.f32 %v140, 1e-05
    %v149 = vadd.f32 %v141, 1e-05
    %v150 = vadd.f32 %v142, 1e-05
    %v151 = vadd.f32 %v143, 1e-05
    %v152 = vadd.f32 %v144, 1e-05
    %v153 = vadd.f32 %v145, 1e-05
    %v154 = vrsqrt.pop %v146
    %v155 = vrsqrt.pop %v147
    %v156 = vrsqrt.pop %v148
    %v157 = vrsqrt.pop %v149
    %v158 = vrsqrt.pop %v150
    %v159 = vrsqrt.pop %v151
    %v160 = vrsqrt.pop %v152
    %v161 = vrsqrt.pop %v153
    %v162 = vmul.f32 %v82, %v154
    %v163 = vmul.f32 %v83, %v154
    %v164 = vmul.f32 %v84, %v155
    %v165 = vmul.f32 %v85, %v155
    %v166 = vmul.f32 %v86, %v156
    %v167 = vmul.f32 %v87, %v156
    %v168 = vmul.f32 %v88, %v157
    %v169 = vmul.f32 %v89, %v157
    %v170 = vmul.f32 %v90, %v158
    %v171 = vmul.f32 %v91, %v158
    %v172 = vmul.f32 %v92, %v159
    %v173 = vmul.f32 %v93, %v159
    %v174 = vmul.f32 %v94, %v160
    %v175 = vmul.f32 %v95, %v160
    %v176 = vmul.f32 %v96, %v161
    %v177 = vmul.f32 %v97, %v161
    %v179 = vlaneseq
    %v180 = vshrl.u32 %v179, 7
    %v181 = vsub.s32 0, %v180
    %v182 = vrot.slane %v38, %v181
    %v183 = vlaneseq
    %v184 = vshrl.u32 %v183, 7
    %v185 = vsub.s32 1, %v184
    %v186 = vrot.slane %v38, %v185
    %v189 = vmul.f32 %v162, %v182
    %v190 = vmul.f32 %v163, %v186
    %v191 = vmul.f32 %v164, %v182
    %v192 = vmul.f32 %v165, %v186
    %v193 = vmul.f32 %v166, %v182
    %v194 = vmul.f32 %v167, %v186
    %v195 = vmul.f32 %v168, %v182
    %v196 = vmul.f32 %v169, %v186
    %v197 = vmul.f32 %v170, %v182
    %v198 = vmul.f32 %v171, %v186
    %v199 = vmul.f32 %v172, %v182
    %v200 = vmul.f32 %v173, %v186
    %v201 = vmul.f32 %v174, %v182
    %v202 = vmul.f32 %v175, %v186
    %v203 = vmul.f32 %v176, %v182
    %v204 = vmul.f32 %v177, %v186
    %v206 = vlaneseq
    %v207 = vshrl.u32 %v206, 7
    %v208 = vsub.s32 0, %v207
    %v209 = vrot.slane %v40, %v208
    %v210 = vlaneseq
    %v211 = vshrl.u32 %v210, 7
    %v212 = vsub.s32 1, %v211
    %v213 = vrot.slane %v40, %v212
    %v216 = vadd.f32 %v189, %v209
    %v217 = vadd.f32 %v190, %v213
    %v218 = vadd.f32 %v191, %v209
    %v219 = vadd.f32 %v192, %v213
    %v220 = vadd.f32 %v193, %v209
    %v221 = vadd.f32 %v194, %v213
    %v222 = vadd.f32 %v195, %v209
    %v223 = vadd.f32 %v196, %v213
    %v224 = vadd.f32 %v197, %v209
    %v225 = vadd.f32 %v198, %v213
    %v226 = vadd.f32 %v199, %v209
    %v227 = vadd.f32 %v200, %v213
    %v228 = vadd.f32 %v201, %v209
    %v229 = vadd.f32 %v202, %v213
    %v230 = vadd.f32 %v203, %v209
    %v231 = vadd.f32 %v204, %v213
    %v232 = vpack.c.bf16 %v218, %v216
    %v233 = vpack.c.bf16 %v219, %v217
    %v234 = vpack.c.bf16 %v222, %v220
    %v235 = vpack.c.bf16 %v223, %v221
    %v236 = vpack.c.bf16 %v226, %v224
    %v237 = vpack.c.bf16 %v227, %v225
    %v238 = vpack.c.bf16 %v230, %v228
    %v239 = vpack.c.bf16 %v231, %v229
    %v240 = vld [vmem:[%s2] sm:$0xff]
    %v241 = vld [vmem:[%s2 + $0x8] sm:$0xff]
    %v242 = vld [vmem:[%s2 + $0x10] sm:$0xff]
    %v243 = vld [vmem:[%s2 + $0x18] sm:$0xff]
    %v244 = vld [vmem:[%s2 + $0x20] sm:$0xff]
    %v245 = vld [vmem:[%s2 + $0x28] sm:$0xff]
    %v246 = vld [vmem:[%s2 + $0x30] sm:$0xff]
    %v247 = vld [vmem:[%s2 + $0x38] sm:$0xff]
    %v248 = vld [vmem:[%s2 + $0x40] sm:$0xff]
    %v249 = vld [vmem:[%s2 + $0x48] sm:$0xff]
    %v250 = vld [vmem:[%s2 + $0x50] sm:$0xff]
    %v251 = vld [vmem:[%s2 + $0x58] sm:$0xff]
    %v252 = vld [vmem:[%s2 + $0x60] sm:$0xff]
    %v253 = vld [vmem:[%s2 + $0x68] sm:$0xff]
    %v254 = vld [vmem:[%s2 + $0x70] sm:$0xff]
    %v255 = vld [vmem:[%s2 + $0x78] sm:$0xff]
    %v256 = vld [vmem:[%s2 + $0x80] sm:$0xff]
    %v257 = vld [vmem:[%s2 + $0x88] sm:$0xff]
    %v258 = vld [vmem:[%s2 + $0x90] sm:$0xff]
    %v259 = vld [vmem:[%s2 + $0x98] sm:$0xff]
    %v260 = vld [vmem:[%s2 + $0xa0] sm:$0xff]
    %v261 = vld [vmem:[%s2 + $0xa8] sm:$0xff]
    %v262 = vld [vmem:[%s2 + $0xb0] sm:$0xff]
    %v263 = vld [vmem:[%s2 + $0xb8] sm:$0xff]
    %v264 = vld [vmem:[%s2 + $0xc0] sm:$0xff]
    %v265 = vld [vmem:[%s2 + $0xc8] sm:$0xff]
    %v266 = vld [vmem:[%s2 + $0xd0] sm:$0xff]
    %v267 = vld [vmem:[%s2 + $0xd8] sm:$0xff]
    %v268 = vld [vmem:[%s2 + $0xe0] sm:$0xff]
    %v269 = vld [vmem:[%s2 + $0xe8] sm:$0xff]
    %v270 = vld [vmem:[%s2 + $0xf0] sm:$0xff]
    %v271 = vld [vmem:[%s2 + $0xf8] sm:$0xff]
    %v273 = vlaneseq
    %v274 = vshrl.u32 %v273, 7
    %v275 = vsub.s32 0, %v274
    %v276 = vrot.slane %v42, %v275
    %v277 = vlaneseq
    %v278 = vshrl.u32 %v277, 7
    %v279 = vsub.s32 1, %v278
    %v280 = vrot.slane %v42, %v279
    %v315 = vunpack.c.l.b16 %v240
    %v316 = vunpack.c.h.b16 %v240
    %v317 = vunpack.c.l.b16 %v241
    %v318 = vunpack.c.h.b16 %v241
    %v319 = vunpack.c.l.b16 %v242
    %v320 = vunpack.c.h.b16 %v242
    %v321 = vunpack.c.l.b16 %v243
    %v322 = vunpack.c.h.b16 %v243
    %v323 = vunpack.c.l.b16 %v244
    %v324 = vunpack.c.h.b16 %v244
    %v325 = vunpack.c.l.b16 %v245
    %v326 = vunpack.c.h.b16 %v245
    %v327 = vunpack.c.l.b16 %v246
    %v328 = vunpack.c.h.b16 %v246
    %v329 = vunpack.c.l.b16 %v247
    %v330 = vunpack.c.h.b16 %v247
    %v331 = vunpack.c.l.b16 %v248
    %v332 = vunpack.c.h.b16 %v248
    %v333 = vunpack.c.l.b16 %v249
    %v334 = vunpack.c.h.b16 %v249
    %v335 = vunpack.c.l.b16 %v250
    %v336 = vunpack.c.h.b16 %v250
    %v337 = vunpack.c.l.b16 %v251
    %v338 = vunpack.c.h.b16 %v251
    %v339 = vunpack.c.l.b16 %v252
    %v340 = vunpack.c.h.b16 %v252
    %v341 = vunpack.c.l.b16 %v253
    %v342 = vunpack.c.h.b16 %v253
    %v343 = vunpack.c.l.b16 %v254
    %v344 = vunpack.c.h.b16 %v254
    %v345 = vunpack.c.l.b16 %v255
    %v346 = vunpack.c.h.b16 %v255
    %v347 = vunpack.c.l.b16 %v256
    %v348 = vunpack.c.h.b16 %v256
    %v349 = vunpack.c.l.b16 %v257
    %v350 = vunpack.c.h.b16 %v257
    %v351 = vunpack.c.l.b16 %v258
    %v352 = vunpack.c.h.b16 %v258
    %v353 = vunpack.c.l.b16 %v259
    %v354 = vunpack.c.h.b16 %v259
    %v355 = vunpack.c.l.b16 %v260
    %v356 = vunpack.c.h.b16 %v260
    %v357 = vunpack.c.l.b16 %v261
    %v358 = vunpack.c.h.b16 %v261
    %v359 = vunpack.c.l.b16 %v262
    %v360 = vunpack.c.h.b16 %v262
    %v361 = vunpack.c.l.b16 %v263
    %v362 = vunpack.c.h.b16 %v263
    %v363 = vunpack.c.l.b16 %v264
    %v364 = vunpack.c.h.b16 %v264
    %v365 = vunpack.c.l.b16 %v265
    %v366 = vunpack.c.h.b16 %v265
    %v367 = vunpack.c.l.b16 %v266
    %v368 = vunpack.c.h.b16 %v266
    %v369 = vunpack.c.l.b16 %v267
    %v370 = vunpack.c.h.b16 %v267
    %v371 = vunpack.c.l.b16 %v268
    %v372 = vunpack.c.h.b16 %v268
    %v373 = vunpack.c.l.b16 %v269
    %v374 = vunpack.c.h.b16 %v269
    %v375 = vunpack.c.l.b16 %v270
    %v376 = vunpack.c.h.b16 %v270
    %v377 = vunpack.c.l.b16 %v271
    %v378 = vunpack.c.h.b16 %v271
    %v379 = vpack.c.b16 %v317, %v315
    %v380 = vpack.c.b16 %v318, %v316
    %v381 = vpack.c.b16 %v321, %v319
    %v382 = vpack.c.b16 %v322, %v320
    %v383 = vpack.c.b16 %v325, %v323
    %v384 = vpack.c.b16 %v326, %v324
    %v385 = vpack.c.b16 %v329, %v327
    %v386 = vpack.c.b16 %v330, %v328
    %v387 = vpack.c.b16 %v333, %v331
    %v388 = vpack.c.b16 %v334, %v332
    %v389 = vpack.c.b16 %v337, %v335
    %v390 = vpack.c.b16 %v338, %v336
    %v391 = vpack.c.b16 %v341, %v339
    %v392 = vpack.c.b16 %v342, %v340
    %v393 = vpack.c.b16 %v345, %v343
    %v394 = vpack.c.b16 %v346, %v344
    %v395 = vpack.c.b16 %v349, %v347
    %v396 = vpack.c.b16 %v350, %v348
    %v397 = vpack.c.b16 %v353, %v351
    %v398 = vpack.c.b16 %v354, %v352
    %v399 = vpack.c.b16 %v357, %v355
    %v400 = vpack.c.b16 %v358, %v356
    %v401 = vpack.c.b16 %v361, %v359
    %v402 = vpack.c.b16 %v362, %v360
    %v403 = vpack.c.b16 %v365, %v363
    %v404 = vpack.c.b16 %v366, %v364
    %v405 = vpack.c.b16 %v369, %v367
    %v406 = vpack.c.b16 %v370, %v368
    %v407 = vpack.c.b16 %v373, %v371
    %v408 = vpack.c.b16 %v374, %v372
    %v409 = vpack.c.b16 %v377, %v375
    %v410 = vpack.c.b16 %v378, %v376
    %443 = vmatprep.subr.bf16.mxu0 %v380
    %444 = vmatpush1.bf16.msra.mxu0 %v379
    %445 = vmatprep.subr.bf16.mxu0 %v382
    %446 = vmatpush1.bf16.msra.mxu0 %v381
    %447 = vmatprep.subr.bf16.mxu0 %v384
    %448 = vmatpush1.bf16.msra.mxu0 %v383
    %449 = vmatprep.subr.bf16.mxu0 %v386
    %450 = vmatpush1.bf16.msra.mxu0 %v385
    %451 = vmatprep.subr.bf16.mxu0 %v388
    %452 = vmatpush1.bf16.msra.mxu0 %v387
    %453 = vmatprep.subr.bf16.mxu0 %v390
    %454 = vmatpush1.bf16.msra.mxu0 %v389
    %455 = vmatprep.subr.bf16.mxu0 %v392
    %456 = vmatpush1.bf16.msra.mxu0 %v391
    %457 = vmatprep.subr.bf16.mxu0 %v394
    %458 = vmatpush1.bf16.msra.mxu0 %v393
    %459 = vmatprep.subr.bf16.mxu0 %v396
    %460 = vmatpush1.bf16.msra.mxu0 %v395
    %461 = vmatprep.subr.bf16.mxu0 %v398
    %462 = vmatpush1.bf16.msra.mxu0 %v397
    %463 = vmatprep.subr.bf16.mxu0 %v400
    %464 = vmatpush1.bf16.msra.mxu0 %v399
    %465 = vmatprep.subr.bf16.mxu0 %v402
    %466 = vmatpush1.bf16.msra.mxu0 %v401
    %467 = vmatprep.subr.bf16.mxu0 %v404
    %468 = vmatpush1.bf16.msra.mxu0 %v403
    %469 = vmatprep.subr.bf16.mxu0 %v406
    %470 = vmatpush1.bf16.msra.mxu0 %v405
    %471 = vmatprep.subr.bf16.mxu0 %v408
    %472 = vmatpush1.bf16.msra.mxu0 %v407
    %473 = vmatprep.subr.bf16.mxu0 %v410
    %474 = vmatpush1.bf16.msra.mxu0 %v409
    %475 = vmatprep.mubr.bf16.mxu0 %v233
    %476 = vmatmul.mubr.bf16.gmra.mrb[0].mxu0 %v232
    %v477 = vpop.f32.mrb[0].mxu0
    %v478 = vadd.f32 %v276, %v477
    %v479 = vpop.f32.mrb[0].mxu0
    %v480 = vadd.f32 %v280, %v479
    %v481 = vpop.f32.mrb[0].mxu0
    %v482 = vadd.f32 %v276, %v481
    %v483 = vpop.f32.mrb[0].mxu0
    %v484 = vadd.f32 %v280, %v483
    %485 = vmatprep.mubr.bf16.mxu0 %v235
    %486 = vmatmul.mubr.bf16.gmra.mrb[0].mxu0 %v234
    %v487 = vpop.f32.mrb[0].mxu0
    %v488 = vadd.f32 %v276, %v487
    %v489 = vpop.f32.mrb[0].mxu0
    %v490 = vadd.f32 %v280, %v489
    %v491 = vpop.f32.mrb[0].mxu0
    %v492 = vadd.f32 %v276, %v491
    %v493 = vpop.f32.mrb[0].mxu0
    %v494 = vadd.f32 %v280, %v493
    %495 = vmatprep.mubr.bf16.mxu0 %v237
    %496 = vmatmul.mubr.bf16.gmra.mrb[0].mxu0 %v236
    %v497 = vpop.f32.mrb[0].mxu0
    %v498 = vadd.f32 %v276, %v497
    %v499 = vpop.f32.mrb[0].mxu0
    %v500 = vadd.f32 %v280, %v499
    %v501 = vpop.f32.mrb[0].mxu0
    %v502 = vadd.f32 %v276, %v501
    %v503 = vpop.f32.mrb[0].mxu0
    %v504 = vadd.f32 %v280, %v503
    %505 = vmatprep.mubr.bf16.mxu0 %v239
    %506 = vmatmul.mubr.bf16.gmra.mrb[0].mxu0 %v238
    %v507 = vpop.f32.mrb[0].mxu0
    %v508 = vadd.f32 %v276, %v507
    %v509 = vpop.f32.mrb[0].mxu0
    %v510 = vadd.f32 %v280, %v509
    %v511 = vpop.f32.mrb[0].mxu0
    %v512 = vadd.f32 %v276, %v511
    %v513 = vpop.f32.mrb[0].mxu0
    %v514 = vadd.f32 %v280, %v513
    %515 = vdwg.mxu0
    %vm516 = vcmp.ge.f32.partialorder %v478, 0.0
    %vm517 = vcmp.ge.f32.partialorder %v480, 0.0
    %vm518 = vcmp.ge.f32.partialorder %v482, 0.0
    %vm519 = vcmp.ge.f32.partialorder %v484, 0.0
    %vm520 = vcmp.ge.f32.partialorder %v488, 0.0
    %vm521 = vcmp.ge.f32.partialorder %v490, 0.0
    %vm522 = vcmp.ge.f32.partialorder %v492, 0.0
    %vm523 = vcmp.ge.f32.partialorder %v494, 0.0
    %vm524 = vcmp.ge.f32.partialorder %v498, 0.0
    %vm525 = vcmp.ge.f32.partialorder %v500, 0.0
    %vm526 = vcmp.ge.f32.partialorder %v502, 0.0
    %vm527 = vcmp.ge.f32.partialorder %v504, 0.0
    %vm528 = vcmp.ge.f32.partialorder %v508, 0.0
    %vm529 = vcmp.ge.f32.partialorder %v510, 0.0
    %vm530 = vcmp.ge.f32.partialorder %v512, 0.0
    %vm531 = vcmp.ge.f32.partialorder %v514, 0.0
    %v532 = vmul.f32 %v478, 0.1
    %v533 = vmul.f32 %v480, 0.1
    %v534 = vmul.f32 %v482, 0.1
    %v535 = vmul.f32 %v484, 0.1
    %v536 = vmul.f32 %v488, 0.1
    %v537 = vmul.f32 %v490, 0.1
    %v538 = vmul.f32 %v492, 0.1
    %v539 = vmul.f32 %v494, 0.1
    %v540 = vmul.f32 %v498, 0.1
    %v541 = vmul.f32 %v500, 0.1
    %v542 = vmul.f32 %v502, 0.1
    %v543 = vmul.f32 %v504, 0.1
    %v544 = vmul.f32 %v508, 0.1
    %v545 = vmul.f32 %v510, 0.1
    %v546 = vmul.f32 %v512, 0.1
    %v547 = vmul.f32 %v514, 0.1
    %v548 = vsel %vm516, %v478, %v532
    %v549 = vsel %vm517, %v480, %v533
    %v550 = vsel %vm518, %v482, %v534
    %v551 = vsel %vm519, %v484, %v535
    %v552 = vsel %vm520, %v488, %v536
    %v553 = vsel %vm521, %v490, %v537
    %v554 = vsel %vm522, %v492, %v538
    %v555 = vsel %vm523, %v494, %v539
    %v556 = vsel %vm524, %v498, %v540
    %v557 = vsel %vm525, %v500, %v541
    %v558 = vsel %vm526, %v502, %v542
    %v559 = vsel %vm527, %v504, %v543
    %v560 = vsel %vm528, %v508, %v544
    %v561 = vsel %vm529, %v510, %v545
    %v562 = vsel %vm530, %v512, %v546
    %v563 = vsel %vm531, %v514, %v547
    %v564 = vadd.f32 %v548, %v549
    %565 = vadd.xlane.f32.xlu0 %v564
    %v566 = vpop.xlane.xlu0 %565
    %v567 = vadd.f32 %v550, %v551
    %568 = vadd.xlane.f32.xlu0 %v567
    %v569 = vpop.xlane.xlu0 %568
    %v570 = vadd.f32 %v552, %v553
    %571 = vadd.xlane.f32.xlu0 %v570
    %v572 = vpop.xlane.xlu0 %571
    %v573 = vadd.f32 %v554, %v555
    %574 = vadd.xlane.f32.xlu0 %v573
    %v575 = vpop.xlane.xlu0 %574
    %v576 = vadd.f32 %v556, %v557
    %577 = vadd.xlane.f32.xlu0 %v576
    %v578 = vpop.xlane.xlu0 %577
    %v579 = vadd.f32 %v558, %v559
    %580 = vadd.xlane.f32.xlu0 %v579
    %v581 = vpop.xlane.xlu0 %580
    %v582 = vadd.f32 %v560, %v561
    %583 = vadd.xlane.f32.xlu0 %v582
    %v584 = vpop.xlane.xlu0 %583
    %v585 = vadd.f32 %v562, %v563
    %586 = vadd.xlane.f32.xlu0 %v585
    %v587 = vpop.xlane.xlu0 %586
    %v588 = vmul.f32 %v566, 0.00390625
    %v589 = vmul.f32 %v569, 0.00390625
    %v590 = vmul.f32 %v572, 0.00390625
    %v591 = vmul.f32 %v575, 0.00390625
    %v592 = vmul.f32 %v578, 0.00390625
    %v593 = vmul.f32 %v581, 0.00390625
    %v594 = vmul.f32 %v584, 0.00390625
    %v595 = vmul.f32 %v587, 0.00390625
    %v596 = vsub.f32 %v548, %v588
    %v597 = vsub.f32 %v549, %v588
    %v598 = vsub.f32 %v550, %v589
    %v599 = vsub.f32 %v551, %v589
    %v600 = vsub.f32 %v552, %v590
    %v601 = vsub.f32 %v553, %v590
    %v602 = vsub.f32 %v554, %v591
    %v603 = vsub.f32 %v555, %v591
    %v604 = vsub.f32 %v556, %v592
    %v605 = vsub.f32 %v557, %v592
    %v606 = vsub.f32 %v558, %v593
    %v607 = vsub.f32 %v559, %v593
    %v608 = vsub.f32 %v560, %v594
    %v609 = vsub.f32 %v561, %v594
    %v610 = vsub.f32 %v562, %v595
    %v611 = vsub.f32 %v563, %v595
    %v612 = vmul.f32 %v596, %v596
    %v613 = vmul.f32 %v597, %v597
    %v614 = vmul.f32 %v598, %v598
    %v615 = vmul.f32 %v599, %v599
    %v616 = vmul.f32 %v600, %v600
    %v617 = vmul.f32 %v601, %v601
    %v618 = vmul.f32 %v602, %v602
    %v619 = vmul.f32 %v603, %v603
    %v620 = vmul.f32 %v604, %v604
    %v621 = vmul.f32 %v605, %v605
    %v622 = vmul.f32 %v606, %v606
    %v623 = vmul.f32 %v607, %v607
    %v624 = vmul.f32 %v608, %v608
    %v625 = vmul.f32 %v609, %v609
    %v626 = vmul.f32 %v610, %v610
    %v627 = vmul.f32 %v611, %v611
    %v628 = vadd.f32 %v612, %v613
    %629 = vadd.xlane.f32.xlu0 %v628
    %v630 = vpop.xlane.xlu0 %629
    %v631 = vadd.f32 %v614, %v615
    %632 = vadd.xlane.f32.xlu0 %v631
    %v633 = vpop.xlane.xlu0 %632
    %v634 = vadd.f32 %v616, %v617
    %635 = vadd.xlane.f32.xlu0 %v634
    %v636 = vpop.xlane.xlu0 %635
    %v637 = vadd.f32 %v618, %v619
    %638 = vadd.xlane.f32.xlu0 %v637
    %v639 = vpop.xlane.xlu0 %638
    %v640 = vadd.f32 %v620, %v621
    %641 = vadd.xlane.f32.xlu0 %v640
    %v642 = vpop.xlane.xlu0 %641
    %v643 = vadd.f32 %v622, %v623
    %644 = vadd.xlane.f32.xlu0 %v643
    %v645 = vpop.xlane.xlu0 %644
    %v646 = vadd.f32 %v624, %v625
    %647 = vadd.xlane.f32.xlu0 %v646
    %v648 = vpop.xlane.xlu0 %647
    %v649 = vadd.f32 %v626, %v627
    %650 = vadd.xlane.f32.xlu0 %v649
    %v651 = vpop.xlane.xlu0 %650
    %v652 = vmul.f32 %v630, 0.00390625
    %v653 = vmul.f32 %v633, 0.00390625
    %v654 = vmul.f32 %v636, 0.00390625
    %v655 = vmul.f32 %v639, 0.00390625
    %v656 = vmul.f32 %v642, 0.00390625
    %v657 = vmul.f32 %v645, 0.00390625
    %v658 = vmul.f32 %v648, 0.00390625
    %v659 = vmul.f32 %v651, 0.00390625
    %v660 = vadd.f32 %v652, 1e-05
    %v661 = vadd.f32 %v653, 1e-05
    %v662 = vadd.f32 %v654, 1e-05
    %v663 = vadd.f32 %v655, 1e-05
    %v664 = vadd.f32 %v656, 1e-05
    %v665 = vadd.f32 %v657, 1e-05
    %v666 = vadd.f32 %v658, 1e-05
    %v667 = vadd.f32 %v659, 1e-05
    %v668 = vrsqrt.pop %v660
    %v669 = vrsqrt.pop %v661
    %v670 = vrsqrt.pop %v662
    %v671 = vrsqrt.pop %v663
    %v672 = vrsqrt.pop %v664
    %v673 = vrsqrt.pop %v665
    %v674 = vrsqrt.pop %v666
    %v675 = vrsqrt.pop %v667
    %v676 = vmul.f32 %v596, %v668
    %v677 = vmul.f32 %v597, %v668
    %v678 = vmul.f32 %v598, %v669
    %v679 = vmul.f32 %v599, %v669
    %v680 = vmul.f32 %v600, %v670
    %v681 = vmul.f32 %v601, %v670
    %v682 = vmul.f32 %v602, %v671
    %v683 = vmul.f32 %v603, %v671
    %v684 = vmul.f32 %v604, %v672
    %v685 = vmul.f32 %v605, %v672
    %v686 = vmul.f32 %v606, %v673
    %v687 = vmul.f32 %v607, %v673
    %v688 = vmul.f32 %v608, %v674
    %v689 = vmul.f32 %v609, %v674
    %v690 = vmul.f32 %v610, %v675
    %v691 = vmul.f32 %v611, %v675
    %v693 = vlaneseq
    %v694 = vshrl.u32 %v693, 7
    %v695 = vsub.s32 0, %v694
    %v696 = vrot.slane %v44, %v695
    %v697 = vlaneseq
    %v698 = vshrl.u32 %v697, 7
    %v699 = vsub.s32 1, %v698
    %v700 = vrot.slane %v44, %v699
    %v703 = vmul.f32 %v676, %v696
    %v704 = vmul.f32 %v677, %v700
    %v705 = vmul.f32 %v678, %v696
    %v706 = vmul.f32 %v679, %v700
    %v707 = vmul.f32 %v680, %v696
    %v708 = vmul.f32 %v681, %v700
    %v709 = vmul.f32 %v682, %v696
    %v710 = vmul.f32 %v683, %v700
    %v711 = vmul.f32 %v684, %v696
    %v712 = vmul.f32 %v685, %v700
    %v713 = vmul.f32 %v686, %v696
    %v714 = vmul.f32 %v687, %v700
    %v715 = vmul.f32 %v688, %v696
    %v716 = vmul.f32 %v689, %v700
    %v717 = vmul.f32 %v690, %v696
    %v718 = vmul.f32 %v691, %v700
    %v720 = vlaneseq
    %v721 = vshrl.u32 %v720, 7
    %v722 = vsub.s32 0, %v721
    %v723 = vrot.slane %v46, %v722
    %v724 = vlaneseq
    %v725 = vshrl.u32 %v724, 7
    %v726 = vsub.s32 1, %v725
    %v727 = vrot.slane %v46, %v726
    %v730 = vadd.f32 %v703, %v723
    %v731 = vadd.f32 %v704, %v727
    %v732 = vadd.f32 %v705, %v723
    %v733 = vadd.f32 %v706, %v727
    %v734 = vadd.f32 %v707, %v723
    %v735 = vadd.f32 %v708, %v727
    %v736 = vadd.f32 %v709, %v723
    %v737 = vadd.f32 %v710, %v727
    %v738 = vadd.f32 %v711, %v723
    %v739 = vadd.f32 %v712, %v727
    %v740 = vadd.f32 %v713, %v723
    %v741 = vadd.f32 %v714, %v727
    %v742 = vadd.f32 %v715, %v723
    %v743 = vadd.f32 %v716, %v727
    %v744 = vadd.f32 %v717, %v723
    %v745 = vadd.f32 %v718, %v727
    %v746 = vpack.c.bf16 %v732, %v730
    %v747 = vpack.c.bf16 %v733, %v731
    %v748 = vpack.c.bf16 %v736, %v734
    %v749 = vpack.c.bf16 %v737, %v735
    %v750 = vpack.c.bf16 %v740, %v738
    %v751 = vpack.c.bf16 %v741, %v739
    %v752 = vpack.c.bf16 %v744, %v742
    %v753 = vpack.c.bf16 %v745, %v743
    %v754 = vld [vmem:[%s3] sm:$0xff]
    %v755 = vld [vmem:[%s3 + $0x8] sm:$0xff]
    %v756 = vld [vmem:[%s3 + $0x10] sm:$0xff]
    %v757 = vld [vmem:[%s3 + $0x18] sm:$0xff]
    %v758 = vld [vmem:[%s3 + $0x20] sm:$0xff]
    %v759 = vld [vmem:[%s3 + $0x28] sm:$0xff]
    %v760 = vld [vmem:[%s3 + $0x30] sm:$0xff]
    %v761 = vld [vmem:[%s3 + $0x38] sm:$0xff]
    %v762 = vld [vmem:[%s3 + $0x40] sm:$0xff]
    %v763 = vld [vmem:[%s3 + $0x48] sm:$0xff]
    %v764 = vld [vmem:[%s3 + $0x50] sm:$0xff]
    %v765 = vld [vmem:[%s3 + $0x58] sm:$0xff]
    %v766 = vld [vmem:[%s3 + $0x60] sm:$0xff]
    %v767 = vld [vmem:[%s3 + $0x68] sm:$0xff]
    %v768 = vld [vmem:[%s3 + $0x70] sm:$0xff]
    %v769 = vld [vmem:[%s3 + $0x78] sm:$0xff]
    %v770 = vld [vmem:[%s3 + $0x80] sm:$0xff]
    %v771 = vld [vmem:[%s3 + $0x88] sm:$0xff]
    %v772 = vld [vmem:[%s3 + $0x90] sm:$0xff]
    %v773 = vld [vmem:[%s3 + $0x98] sm:$0xff]
    %v774 = vld [vmem:[%s3 + $0xa0] sm:$0xff]
    %v775 = vld [vmem:[%s3 + $0xa8] sm:$0xff]
    %v776 = vld [vmem:[%s3 + $0xb0] sm:$0xff]
    %v777 = vld [vmem:[%s3 + $0xb8] sm:$0xff]
    %v778 = vld [vmem:[%s3 + $0xc0] sm:$0xff]
    %v779 = vld [vmem:[%s3 + $0xc8] sm:$0xff]
    %v780 = vld [vmem:[%s3 + $0xd0] sm:$0xff]
    %v781 = vld [vmem:[%s3 + $0xd8] sm:$0xff]
    %v782 = vld [vmem:[%s3 + $0xe0] sm:$0xff]
    %v783 = vld [vmem:[%s3 + $0xe8] sm:$0xff]
    %v784 = vld [vmem:[%s3 + $0xf0] sm:$0xff]
    %v785 = vld [vmem:[%s3 + $0xf8] sm:$0xff]
    %v787 = vlaneseq
    %v788 = vshrl.u32 %v787, 7
    %v789 = vsub.s32 0, %v788
    %v790 = vrot.slane %v48, %v789
    %v791 = vlaneseq
    %v792 = vshrl.u32 %v791, 7
    %v793 = vsub.s32 1, %v792
    %v794 = vrot.slane %v48, %v793
    %v829 = vunpack.c.l.b16 %v754
    %v830 = vunpack.c.h.b16 %v754
    %v831 = vunpack.c.l.b16 %v755
    %v832 = vunpack.c.h.b16 %v755
    %v833 = vunpack.c.l.b16 %v756
    %v834 = vunpack.c.h.b16 %v756
    %v835 = vunpack.c.l.b16 %v757
    %v836 = vunpack.c.h.b16 %v757
    %v837 = vunpack.c.l.b16 %v758
    %v838 = vunpack.c.h.b16 %v758
    %v839 = vunpack.c.l.b16 %v759
    %v840 = vunpack.c.h.b16 %v759
    %v841 = vunpack.c.l.b16 %v760
    %v842 = vunpack.c.h.b16 %v760
    %v843 = vunpack.c.l.b16 %v761
    %v844 = vunpack.c.h.b16 %v761
    %v845 = vunpack.c.l.b16 %v762
    %v846 = vunpack.c.h.b16 %v762
    %v847 = vunpack.c.l.b16 %v763
    %v848 = vunpack.c.h.b16 %v763
    %v849 = vunpack.c.l.b16 %v764
    %v850 = vunpack.c.h.b16 %v764
    %v851 = vunpack.c.l.b16 %v765
    %v852 = vunpack.c.h.b16 %v765
    %v853 = vunpack.c.l.b16 %v766
    %v854 = vunpack.c.h.b16 %v766
    %v855 = vunpack.c.l.b16 %v767
    %v856 = vunpack.c.h.b16 %v767
    %v857 = vunpack.c.l.b16 %v768
    %v858 = vunpack.c.h.b16 %v768
    %v859 = vunpack.c.l.b16 %v769
    %v860 = vunpack.c.h.b16 %v769
    %v861 = vunpack.c.l.b16 %v770
    %v862 = vunpack.c.h.b16 %v770
    %v863 = vunpack.c.l.b16 %v771
    %v864 = vunpack.c.h.b16 %v771
    %v865 = vunpack.c.l.b16 %v772
    %v866 = vunpack.c.h.b16 %v772
    %v867 = vunpack.c.l.b16 %v773
    %v868 = vunpack.c.h.b16 %v773
    %v869 = vunpack.c.l.b16 %v774
    %v870 = vunpack.c.h.b16 %v774
    %v871 = vunpack.c.l.b16 %v775
    %v872 = vunpack.c.h.b16 %v775
    %v873 = vunpack.c.l.b16 %v776
    %v874 = vunpack.c.h.b16 %v776
    %v875 = vunpack.c.l.b16 %v777
    %v876 = vunpack.c.h.b16 %v777
    %v877 = vunpack.c.l.b16 %v778
    %v878 = vunpack.c.h.b16 %v778
    %v879 = vunpack.c.l.b16 %v779
    %v880 = vunpack.c.h.b16 %v779
    %v881 = vunpack.c.l.b16 %v780
    %v882 = vunpack.c.h.b16 %v780
    %v883 = vunpack.c.l.b16 %v781
    %v884 = vunpack.c.h.b16 %v781
    %v885 = vunpack.c.l.b16 %v782
    %v886 = vunpack.c.h.b16 %v782
    %v887 = vunpack.c.l.b16 %v783
    %v888 = vunpack.c.h.b16 %v783
    %v889 = vunpack.c.l.b16 %v784
    %v890 = vunpack.c.h.b16 %v784
    %v891 = vunpack.c.l.b16 %v785
    %v892 = vunpack.c.h.b16 %v785
    %v893 = vpack.c.b16 %v831, %v829
    %v894 = vpack.c.b16 %v832, %v830
    %v895 = vpack.c.b16 %v835, %v833
    %v896 = vpack.c.b16 %v836, %v834
    %v897 = vpack.c.b16 %v839, %v837
    %v898 = vpack.c.b16 %v840, %v838
    %v899 = vpack.c.b16 %v843, %v841
    %v900 = vpack.c.b16 %v844, %v842
    %v901 = vpack.c.b16 %v847, %v845
    %v902 = vpack.c.b16 %v848, %v846
    %v903 = vpack.c.b16 %v851, %v849
    %v904 = vpack.c.b16 %v852, %v850
    %v905 = vpack.c.b16 %v855, %v853
    %v906 = vpack.c.b16 %v856, %v854
    %v907 = vpack.c.b16 %v859, %v857
    %v908 = vpack.c.b16 %v860, %v858
    %v909 = vpack.c.b16 %v863, %v861
    %v910 = vpack.c.b16 %v864, %v862
    %v911 = vpack.c.b16 %v867, %v865
    %v912 = vpack.c.b16 %v868, %v866
    %v913 = vpack.c.b16 %v871, %v869
    %v914 = vpack.c.b16 %v872, %v870
    %v915 = vpack.c.b16 %v875, %v873
    %v916 = vpack.c.b16 %v876, %v874
    %v917 = vpack.c.b16 %v879, %v877
    %v918 = vpack.c.b16 %v880, %v878
    %v919 = vpack.c.b16 %v883, %v881
    %v920 = vpack.c.b16 %v884, %v882
    %v921 = vpack.c.b16 %v887, %v885
    %v922 = vpack.c.b16 %v888, %v886
    %v923 = vpack.c.b16 %v891, %v889
    %v924 = vpack.c.b16 %v892, %v890
    %957 = vmatprep.subr.bf16.mxu0 %v894
    %958 = vmatpush1.bf16.msra.mxu0 %v893
    %959 = vmatprep.subr.bf16.mxu0 %v896
    %960 = vmatpush1.bf16.msra.mxu0 %v895
    %961 = vmatprep.subr.bf16.mxu0 %v898
    %962 = vmatpush1.bf16.msra.mxu0 %v897
    %963 = vmatprep.subr.bf16.mxu0 %v900
    %964 = vmatpush1.bf16.msra.mxu0 %v899
    %965 = vmatprep.subr.bf16.mxu0 %v902
    %966 = vmatpush1.bf16.msra.mxu0 %v901
    %967 = vmatprep.subr.bf16.mxu0 %v904
    %968 = vmatpush1.bf16.msra.mxu0 %v903
    %969 = vmatprep.subr.bf16.mxu0 %v906
    %970 = vmatpush1.bf16.msra.mxu0 %v905
    %971 = vmatprep.subr.bf16.mxu0 %v908
    %972 = vmatpush1.bf16.msra.mxu0 %v907
    %973 = vmatprep.subr.bf16.mxu0 %v910
    %974 = vmatpush1.bf16.msra.mxu0 %v909
    %975 = vmatprep.subr.bf16.mxu0 %v912
    %976 = vmatpush1.bf16.msra.mxu0 %v911
    %977 = vmatprep.subr.bf16.mxu0 %v914
    %978 = vmatpush1.bf16.msra.mxu0 %v913
    %979 = vmatprep.subr.bf16.mxu0 %v916
    %980 = vmatpush1.bf16.msra.mxu0 %v915
    %981 = vmatprep.subr.bf16.mxu0 %v918
    %982 = vmatpush1.bf16.msra.mxu0 %v917
    %983 = vmatprep.subr.bf16.mxu0 %v920
    %984 = vmatpush1.bf16.msra.mxu0 %v919
    %985 = vmatprep.subr.bf16.mxu0 %v922
    %986 = vmatpush1.bf16.msra.mxu0 %v921
    %987 = vmatprep.subr.bf16.mxu0 %v924
    %988 = vmatpush1.bf16.msra.mxu0 %v923
    %989 = vmatprep.mubr.bf16.mxu0 %v747
    %990 = vmatmul.mubr.bf16.gmra.mrb[0].mxu0 %v746
    %v991 = vpop.f32.mrb[0].mxu0
    %v992 = vadd.f32 %v790, %v991
    %v993 = vpop.f32.mrb[0].mxu0
    %v994 = vadd.f32 %v794, %v993
    %v995 = vpop.f32.mrb[0].mxu0
    %v996 = vadd.f32 %v790, %v995
    %v997 = vpop.f32.mrb[0].mxu0
    %v998 = vadd.f32 %v794, %v997
    %999 = vmatprep.mubr.bf16.mxu0 %v749
    %1000 = vmatmul.mubr.bf16.gmra.mrb[0].mxu0 %v748
    %v1001 = vpop.f32.mrb[0].mxu0
    %v1002 = vadd.f32 %v790, %v1001
    %v1003 = vpop.f32.mrb[0].mxu0
    %v1004 = vadd.f32 %v794, %v1003
    %v1005 = vpop.f32.mrb[0].mxu0
    %v1006 = vadd.f32 %v790, %v1005
    %v1007 = vpop.f32.mrb[0].mxu0
    %v1008 = vadd.f32 %v794, %v1007
    %1009 = vmatprep.mubr.bf16.mxu0 %v751
    %1010 = vmatmul.mubr.bf16.gmra.mrb[0].mxu0 %v750
    %v1011 = vpop.f32.mrb[0].mxu0
    %v1012 = vadd.f32 %v790, %v1011
    %v1013 = vpop.f32.mrb[0].mxu0
    %v1014 = vadd.f32 %v794, %v1013
    %v1015 = vpop.f32.mrb[0].mxu0
    %v1016 = vadd.f32 %v790, %v1015
    %v1017 = vpop.f32.mrb[0].mxu0
    %v1018 = vadd.f32 %v794, %v1017
    %1019 = vmatprep.mubr.bf16.mxu0 %v753
    %1020 = vmatmul.mubr.bf16.gmra.mrb[0].mxu0 %v752
    %v1021 = vpop.f32.mrb[0].mxu0
    %v1022 = vadd.f32 %v790, %v1021
    %v1023 = vpop.f32.mrb[0].mxu0
    %v1024 = vadd.f32 %v794, %v1023
    %v1025 = vpop.f32.mrb[0].mxu0
    %v1026 = vadd.f32 %v790, %v1025
    %v1027 = vpop.f32.mrb[0].mxu0
    %v1028 = vadd.f32 %v794, %v1027
    %1029 = vdwg.mxu0
    %vm1030 = vcmp.ge.f32.partialorder %v992, 0.0
    %vm1031 = vcmp.ge.f32.partialorder %v994, 0.0
    %vm1032 = vcmp.ge.f32.partialorder %v996, 0.0
    %vm1033 = vcmp.ge.f32.partialorder %v998, 0.0
    %vm1034 = vcmp.ge.f32.partialorder %v1002, 0.0
    %vm1035 = vcmp.ge.f32.partialorder %v1004, 0.0
    %vm1036 = vcmp.ge.f32.partialorder %v1006, 0.0
    %vm1037 = vcmp.ge.f32.partialorder %v1008, 0.0
    %vm1038 = vcmp.ge.f32.partialorder %v1012, 0.0
    %vm1039 = vcmp.ge.f32.partialorder %v1014, 0.0
    %vm1040 = vcmp.ge.f32.partialorder %v1016, 0.0
    %vm1041 = vcmp.ge.f32.partialorder %v1018, 0.0
    %vm1042 = vcmp.ge.f32.partialorder %v1022, 0.0
    %vm1043 = vcmp.ge.f32.partialorder %v1024, 0.0
    %vm1044 = vcmp.ge.f32.partialorder %v1026, 0.0
    %vm1045 = vcmp.ge.f32.partialorder %v1028, 0.0
    %v1046 = vmul.f32 %v992, 0.1
    %v1047 = vmul.f32 %v994, 0.1
    %v1048 = vmul.f32 %v996, 0.1
    %v1049 = vmul.f32 %v998, 0.1
    %v1050 = vmul.f32 %v1002, 0.1
    %v1051 = vmul.f32 %v1004, 0.1
    %v1052 = vmul.f32 %v1006, 0.1
    %v1053 = vmul.f32 %v1008, 0.1
    %v1054 = vmul.f32 %v1012, 0.1
    %v1055 = vmul.f32 %v1014, 0.1
    %v1056 = vmul.f32 %v1016, 0.1
    %v1057 = vmul.f32 %v1018, 0.1
    %v1058 = vmul.f32 %v1022, 0.1
    %v1059 = vmul.f32 %v1024, 0.1
    %v1060 = vmul.f32 %v1026, 0.1
    %v1061 = vmul.f32 %v1028, 0.1
    %v1062 = vsel %vm1030, %v992, %v1046
    %v1063 = vsel %vm1031, %v994, %v1047
    %v1064 = vsel %vm1032, %v996, %v1048
    %v1065 = vsel %vm1033, %v998, %v1049
    %v1066 = vsel %vm1034, %v1002, %v1050
    %v1067 = vsel %vm1035, %v1004, %v1051
    %v1068 = vsel %vm1036, %v1006, %v1052
    %v1069 = vsel %vm1037, %v1008, %v1053
    %v1070 = vsel %vm1038, %v1012, %v1054
    %v1071 = vsel %vm1039, %v1014, %v1055
    %v1072 = vsel %vm1040, %v1016, %v1056
    %v1073 = vsel %vm1041, %v1018, %v1057
    %v1074 = vsel %vm1042, %v1022, %v1058
    %v1075 = vsel %vm1043, %v1024, %v1059
    %v1076 = vsel %vm1044, %v1026, %v1060
    %v1077 = vsel %vm1045, %v1028, %v1061
    %v1078 = vpack.c.bf16 %v1064, %v1062
    %v1079 = vpack.c.bf16 %v1065, %v1063
    %v1080 = vpack.c.bf16 %v1068, %v1066
    %v1081 = vpack.c.bf16 %v1069, %v1067
    %v1082 = vpack.c.bf16 %v1072, %v1070
    %v1083 = vpack.c.bf16 %v1073, %v1071
    %v1084 = vpack.c.bf16 %v1076, %v1074
    %v1085 = vpack.c.bf16 %v1077, %v1075
    %v1086 = vld [vmem:[%s4] sm:$0xf]
    %v1087 = vld [vmem:[%s4 + $0x4] sm:$0xf]
    %v1088 = vld [vmem:[%s4 + $0x8] sm:$0xf]
    %v1089 = vld [vmem:[%s4 + $0xc] sm:$0xf]
    %v1090 = vld [vmem:[%s4 + $0x10] sm:$0xf]
    %v1091 = vld [vmem:[%s4 + $0x14] sm:$0xf]
    %v1092 = vld [vmem:[%s4 + $0x18] sm:$0xf]
    %v1093 = vld [vmem:[%s4 + $0x1c] sm:$0xf]
    %v1094 = vld [vmem:[%s4 + $0x20] sm:$0xf]
    %v1095 = vld [vmem:[%s4 + $0x24] sm:$0xf]
    %v1096 = vld [vmem:[%s4 + $0x28] sm:$0xf]
    %v1097 = vld [vmem:[%s4 + $0x2c] sm:$0xf]
    %v1098 = vld [vmem:[%s4 + $0x30] sm:$0xf]
    %v1099 = vld [vmem:[%s4 + $0x34] sm:$0xf]
    %v1100 = vld [vmem:[%s4 + $0x38] sm:$0xf]
    %v1101 = vld [vmem:[%s4 + $0x3c] sm:$0xf]
    %v1102 = vld [vmem:[%s4 + $0x40] sm:$0xf]
    %v1103 = vld [vmem:[%s4 + $0x44] sm:$0xf]
    %v1104 = vld [vmem:[%s4 + $0x48] sm:$0xf]
    %v1105 = vld [vmem:[%s4 + $0x4c] sm:$0xf]
    %v1106 = vld [vmem:[%s4 + $0x50] sm:$0xf]
    %v1107 = vld [vmem:[%s4 + $0x54] sm:$0xf]
    %v1108 = vld [vmem:[%s4 + $0x58] sm:$0xf]
    %v1109 = vld [vmem:[%s4 + $0x5c] sm:$0xf]
    %v1110 = vld [vmem:[%s4 + $0x60] sm:$0xf]
    %v1111 = vld [vmem:[%s4 + $0x64] sm:$0xf]
    %v1112 = vld [vmem:[%s4 + $0x68] sm:$0xf]
    %v1113 = vld [vmem:[%s4 + $0x6c] sm:$0xf]
    %v1114 = vld [vmem:[%s4 + $0x70] sm:$0xf]
    %v1115 = vld [vmem:[%s4 + $0x74] sm:$0xf]
    %v1116 = vld [vmem:[%s4 + $0x78] sm:$0xf]
    %v1117 = vld [vmem:[%s4 + $0x7c] sm:$0xf]
    %v1150 = vunpack.c.l.b16 %v1086
    %v1151 = vunpack.c.l.b16 %v1087
    %v1152 = vunpack.c.l.b16 %v1088
    %v1153 = vunpack.c.l.b16 %v1089
    %v1154 = vunpack.c.l.b16 %v1090
    %v1155 = vunpack.c.l.b16 %v1091
    %v1156 = vunpack.c.l.b16 %v1092
    %v1157 = vunpack.c.l.b16 %v1093
    %v1158 = vunpack.c.l.b16 %v1094
    %v1159 = vunpack.c.l.b16 %v1095
    %v1160 = vunpack.c.l.b16 %v1096
    %v1161 = vunpack.c.l.b16 %v1097
    %v1162 = vunpack.c.l.b16 %v1098
    %v1163 = vunpack.c.l.b16 %v1099
    %v1164 = vunpack.c.l.b16 %v1100
    %v1165 = vunpack.c.l.b16 %v1101
    %v1166 = vunpack.c.l.b16 %v1102
    %v1167 = vunpack.c.l.b16 %v1103
    %v1168 = vunpack.c.l.b16 %v1104
    %v1169 = vunpack.c.l.b16 %v1105
    %v1170 = vunpack.c.l.b16 %v1106
    %v1171 = vunpack.c.l.b16 %v1107
    %v1172 = vunpack.c.l.b16 %v1108
    %v1173 = vunpack.c.l.b16 %v1109
    %v1174 = vunpack.c.l.b16 %v1110
    %v1175 = vunpack.c.l.b16 %v1111
    %v1176 = vunpack.c.l.b16 %v1112
    %v1177 = vunpack.c.l.b16 %v1113
    %v1178 = vunpack.c.l.b16 %v1114
    %v1179 = vunpack.c.l.b16 %v1115
    %v1180 = vunpack.c.l.b16 %v1116
    %v1181 = vunpack.c.l.b16 %v1117
    %v1182 = vpack.c.b16 %v1151, %v1150
    %v1183 = vpack.c.b16 %v1153, %v1152
    %v1184 = vpack.c.b16 %v1155, %v1154
    %v1185 = vpack.c.b16 %v1157, %v1156
    %v1186 = vpack.c.b16 %v1159, %v1158
    %v1187 = vpack.c.b16 %v1161, %v1160
    %v1188 = vpack.c.b16 %v1163, %v1162
    %v1189 = vpack.c.b16 %v1165, %v1164
    %v1190 = vpack.c.b16 %v1167, %v1166
    %v1191 = vpack.c.b16 %v1169, %v1168
    %v1192 = vpack.c.b16 %v1171, %v1170
    %v1193 = vpack.c.b16 %v1173, %v1172
    %v1194 = vpack.c.b16 %v1175, %v1174
    %v1195 = vpack.c.b16 %v1177, %v1176
    %v1196 = vpack.c.b16 %v1179, %v1178
    %v1197 = vpack.c.b16 %v1181, %v1180
    %1214 = vmatprep.subr.bf16.mxu0 0
    %1215 = vmatpush1.bf16.msra.mxu0 %v1182
    %1216 = vmatprep.subr.bf16.mxu0 0
    %1217 = vmatpush1.bf16.msra.mxu0 %v1183
    %1218 = vmatprep.subr.bf16.mxu0 0
    %1219 = vmatpush1.bf16.msra.mxu0 %v1184
    %1220 = vmatprep.subr.bf16.mxu0 0
    %1221 = vmatpush1.bf16.msra.mxu0 %v1185
    %1222 = vmatprep.subr.bf16.mxu0 0
    %1223 = vmatpush1.bf16.msra.mxu0 %v1186
    %1224 = vmatprep.subr.bf16.mxu0 0
    %1225 = vmatpush1.bf16.msra.mxu0 %v1187
    %1226 = vmatprep.subr.bf16.mxu0 0
    %1227 = vmatpush1.bf16.msra.mxu0 %v1188
    %1228 = vmatprep.subr.bf16.mxu0 0
    %1229 = vmatpush1.bf16.msra.mxu0 %v1189
    %1230 = vmatprep.subr.bf16.mxu0 0
    %1231 = vmatpush1.bf16.msra.mxu0 %v1190
    %1232 = vmatprep.subr.bf16.mxu0 0
    %1233 = vmatpush1.bf16.msra.mxu0 %v1191
    %1234 = vmatprep.subr.bf16.mxu0 0
    %1235 = vmatpush1.bf16.msra.mxu0 %v1192
    %1236 = vmatprep.subr.bf16.mxu0 0
    %1237 = vmatpush1.bf16.msra.mxu0 %v1193
    %1238 = vmatprep.subr.bf16.mxu0 0
    %1239 = vmatpush1.bf16.msra.mxu0 %v1194
    %1240 = vmatprep.subr.bf16.mxu0 0
    %1241 = vmatpush1.bf16.msra.mxu0 %v1195
    %1242 = vmatprep.subr.bf16.mxu0 0
    %1243 = vmatpush1.bf16.msra.mxu0 %v1196
    %1244 = vmatprep.subr.bf16.mxu0 0
    %1245 = vmatpush1.bf16.msra.mxu0 %v1197
    %1246 = vmatprep.mubr.bf16.mxu0 %v1079
    %1247 = vmatmul.mubr.bf16.gmra.mrb[0].mxu0 %v1078
    %v1248 = vpop.f32.mrb[0].mxu0
    %v1249 = vadd.f32 %v49, %v1248
    %v1250 = vpop.f32.mrb[0].mxu0
    %v1251 = vpop.f32.mrb[0].mxu0
    %v1252 = vadd.f32 %v49, %v1251
    %v1253 = vpop.f32.mrb[0].mxu0
    %1254 = vmatprep.mubr.bf16.mxu0 %v1081
    %1255 = vmatmul.mubr.bf16.gmra.mrb[0].mxu0 %v1080
    %v1256 = vpop.f32.mrb[0].mxu0
    %v1257 = vadd.f32 %v49, %v1256
    %v1258 = vpop.f32.mrb[0].mxu0
    %v1259 = vpop.f32.mrb[0].mxu0
    %v1260 = vadd.f32 %v49, %v1259
    %v1261 = vpop.f32.mrb[0].mxu0
    %1262 = vmatprep.mubr.bf16.mxu0 %v1083
    %1263 = vmatmul.mubr.bf16.gmra.mrb[0].mxu0 %v1082
    %v1264 = vpop.f32.mrb[0].mxu0
    %v1265 = vadd.f32 %v49, %v1264
    %v1266 = vpop.f32.mrb[0].mxu0
    %v1267 = vpop.f32.mrb[0].mxu0
    %v1268 = vadd.f32 %v49, %v1267
    %v1269 = vpop.f32.mrb[0].mxu0
    %1270 = vmatprep.mubr.bf16.mxu0 %v1085
    %1271 = vmatmul.mubr.bf16.gmra.mrb[0].mxu0 %v1084
    %v1272 = vpop.f32.mrb[0].mxu0
    %v1273 = vadd.f32 %v49, %v1272
    %v1274 = vpop.f32.mrb[0].mxu0
    %v1275 = vpop.f32.mrb[0].mxu0
    %v1276 = vadd.f32 %v49, %v1275
    %v1277 = vpop.f32.mrb[0].mxu0
    %1278 = vdwg.mxu0
    %v1279 = vtanh.pop %v1249
    %v1280 = vtanh.pop %v1252
    %v1281 = vtanh.pop %v1257
    %v1282 = vtanh.pop %v1260
    %v1283 = vtanh.pop %v1265
    %v1284 = vtanh.pop %v1268
    %v1285 = vtanh.pop %v1273
    %v1286 = vtanh.pop %v1276
    %1287 = vst [vmem:[#allocation2] sm:$0xff] %v1279
    %1288 = vst [vmem:[#allocation2 + $0x8] sm:$0xff] %v1280
    %1289 = vst [vmem:[#allocation2 + $0x10] sm:$0xff] %v1281
    %1290 = vst [vmem:[#allocation2 + $0x18] sm:$0xff] %v1282
    %1291 = vst [vmem:[#allocation2 + $0x20] sm:$0xff] %v1283
    %1292 = vst [vmem:[#allocation2 + $0x28] sm:$0xff] %v1284
    %1293 = vst [vmem:[#allocation2 + $0x30] sm:$0xff] %v1285
    %1294 = vst [vmem:[#allocation2 + $0x38] sm:$0xff] %v1286
    // Predicated region
    $region22: #{decoder_forward.1} parent=1 // pred_check
      _
    $region23: #{decoder_forward.1} parent=1 // pred_check_branch
      %1296 = sbr.rel (0) target = $region25
    $region24: #{decoder_forward.1} parent=1 // pred_region
      %s1298 = ssub.s32 1024, 1024
      %1299 = vsyncadd [#allocation3], %s1298
      %s1300 = sshll.u32 [#allocation2], 4
      %s1301 = int_to_ptr.vmem [resolvable:$true] %s1300
      %1306 = dma.vmem_to_hbm [thread:$0]  %s1301, 1024, %s5, [#allocation3], 128, 128, 8
    $region25: #{decoder_forward.1} parent=1 // pred_fallthru
      _
    // Predicated region
    $region26: #{decoder_forward.1} parent=1 // pred_check
      _
    $region27: #{decoder_forward.1} parent=1 // pred_check_branch
      %1308 = sbr.rel (0) target = $region29
    $region28: #{decoder_forward.1} parent=1 // pred_region
      %1309 = dma.done [#allocation3], 1024
    $region29: #{decoder_forward.1} parent=1 // pred_fallthru
      _
    %1310 = vsyncpa [#allocation3], 1

</llo_original>
